<compile_context>
chip_gen: v7x
topology: tpu7x:2x2x1
jax: 0.10.0
libtpu: 0.0.40
codegen_flags: <defaults>
</compile_context>

<pallas_src>
import functools

import jax
import jax.numpy as jnp
from jax.experimental import pallas as pl
from jax.experimental.pallas import tpu as pltpu


def _channel_attention_kernel(x_ref, w1t_ref, w2t_ref, out_ref,
                              sum_acc, max_acc, pooled, *,
                              hw, t_hw, tb, n_sub, need_mask):
    # x_ref:   (tb, C, t_hw)   native dtype tile
    # w1t_ref: (C, Cr)  f32    conv1 weight, transposed
    # w2t_ref: (Cr, C)  f32    conv2 weight, transposed
    # out_ref: (tb, C)         same block for every HW step (resident output)
    # sum_acc/max_acc: (tb, C, 128) f32 lane-wide accumulators
    # pooled:  (2*tb, C) f32   stacked avg/max rows for the fused MLP
    k = pl.program_id(1)
    n_k = pl.num_programs(1)

    @pl.when(k == 0)
    def _init():
        sum_acc[...] = jnp.zeros_like(sum_acc)
        max_acc[...] = jnp.full_like(max_acc, -jnp.inf)

    # Native dtype in HBM (halves traffic for bf16 inputs); cast per-tile to
    # f32 in-vreg for exact accumulation (v5e VPU has no bf16 ALU anyway).
    x = x_ref[...].astype(jnp.float32)                       # (tb, C, t_hw)

    def _accumulate(x_for_sum, x_for_max):
        # Fold the tile into the lane-wide accumulators via 128-lane chunks:
        # slicing at lane-tile boundaries is free and the adds/maxes are pure
        # VALU; no per-step cross-lane (XLU) reduction.
        ps = x_for_sum[:, :, 0:128]
        pm = x_for_max[:, :, 0:128]
        for s in range(1, n_sub):
            lo = s * 128
            ps = ps + x_for_sum[:, :, lo:lo + 128]
            pm = jnp.maximum(pm, x_for_max[:, :, lo:lo + 128])
        sum_acc[...] += ps
        max_acc[...] = jnp.maximum(max_acc[...], pm)

    if need_mask:
        # Tail columns only exist in the very last HW step; all other steps
        # take the unmasked fast path.
        @pl.when(k < n_k - 1)
        def _steady():
            _accumulate(x, x)

        @pl.when(k == n_k - 1)
        def _tail():
            col = k * t_hw + jax.lax.broadcasted_iota(jnp.int32, x.shape, 2)
            valid = col < hw
            _accumulate(jnp.where(valid, x, 0.0),
                        jnp.where(valid, x, -jnp.inf))
    else:
        _accumulate(x, x)

    @pl.when(k == n_k - 1)
    def _finalize():
        # One-shot cross-lane reduction of the lane-wide accumulators.
        avg = jnp.sum(sum_acc[...], axis=-1) / hw              # (tb, C)
        mx = jnp.max(max_acc[...], axis=-1)                    # (tb, C)
        # Stack avg/max rows so each MLP layer is a single MXU pass.
        pooled[0:tb, :] = avg
        pooled[tb:2 * tb, :] = mx
        h = jnp.dot(pooled[...], w1t_ref[...],
                    preferred_element_type=jnp.float32)
        h = jnp.maximum(h, 0.0)
        o = jnp.dot(h, w2t_ref[...], preferred_element_type=jnp.float32)
        out = jax.nn.sigmoid(o[:tb] + o[tb:])
        out_ref[...] = out.astype(out_ref.dtype)


def _vmem_capacity_bytes():
    """Per-core VMEM capacity; conservative fallback if the query fails."""
    try:
        cap = getattr(pltpu.get_tpu_info(), "vmem_capacity_bytes", None)
        if cap:
            return int(cap)
    except Exception:
        pass
    return 64 << 20     # safe lower bound across v5e / v6e / v7x


def channel_attention(x, w1, w2, *, t_hw=None, tb=None):
    """CBAM channel attention.

    x:  (B, C, H, W) NCHW input.
    w1: (Cr, C) conv1 1x1 weight (C -> C//reduction), no bias.
    w2: (C, Cr) conv2 1x1 weight (C//reduction -> C), no bias.
    Returns sigmoid(mlp(avg_pool(x)) + mlp(max_pool(x))), shape (B, C, 1, 1).
    """
    B, C, H, W = x.shape
    HW = H * W
    Cr = w1.shape[0]
    x_itemsize = jnp.dtype(x.dtype).itemsize
    vmem_cap = _vmem_capacity_bytes()

    # Batch tile: keep the output block (tb, C) sublane-legal (tb % 8 == 0 or
    # tb == B) and, for B > 8, guarantee >= 2 batch tiles so the "parallel"
    # axis can feed both TensorCores on v7x.
    if tb is None:
        tb = 8 if B > 8 else B
    # TODO(synk): for tiny B on v7x, split the HW reduction into two "parallel"
    # halves (partial sum/max + small XLA epilogue) so both TCs get work.

    # HW tile from a VMEM byte budget (double-buffered x tile): ~8 MiB on
    # 128 MiB-VMEM parts (v5e/v6e), ~4 MiB on 64 MiB parts (v7x).
    max_t_hw = pl.cdiv(HW, 128) * 128
    if t_hw is None:
        tile_budget = (8 << 20) if vmem_cap >= (96 << 20) else (4 << 20)
        t_hw = (tile_budget // 2) // max(1, tb * C * x_itemsize)
    t_hw = max(128, (int(t_hw) // 128) * 128)
    t_hw = min(t_hw, max_t_hw)
    n_sub = t_hw // 128
    need_mask = (HW % t_hw) != 0

    # Keep x in its native dtype in HBM; cast happens per tile in the kernel.
    x_flat = x.reshape(B, C, HW)
    w1t = jnp.transpose(w1).astype(jnp.float32)               # (C, Cr)
    w2t = jnp.transpose(w2).astype(jnp.float32)               # (Cr, C)

    grid = (pl.cdiv(B, tb), pl.cdiv(HW, t_hw))
    kernel = functools.partial(_channel_attention_kernel,
                               hw=HW, t_hw=t_hw, tb=tb,
                               n_sub=n_sub, need_mask=need_mask)

    # VMEM: pipelined x tiles + weights + lane-wide accumulators + pooled +
    # out block + headroom; clamp to ~80% of the physical per-core capacity.
    vmem_bytes = (2 * tb * C * t_hw * x_itemsize
                  + 2 * (C * Cr + Cr * C) * 4
                  + (2 * tb * C * 128 + 2 * tb * C + 2 * tb * C) * 4
                  + (2 << 20))
    vmem_bytes = int(min(max(vmem_bytes, 4 << 20), int(0.8 * vmem_cap)))

    cost = pl.CostEstimate(
        flops=int(2 * B * C * HW + 2 * 2 * B * 2 * C * Cr),
        transcendentals=int(B * C),
        bytes_accessed=int(B * C * HW * x_itemsize
                           + 2 * C * Cr * 4
                           + B * C * x_itemsize),
    )

    out = pl.pallas_call(
        kernel,
        out_shape=jax.ShapeDtypeStruct((B, C), x.dtype),
        grid=grid,
        in_specs=[
            pl.BlockSpec((tb, C, t_hw), lambda i, k: (i, 0, k)),
            pl.BlockSpec((C, Cr), lambda i, k: (0, 0)),
            pl.BlockSpec((Cr, C), lambda i, k: (0, 0)),
        ],
        out_specs=pl.BlockSpec((tb, C), lambda i, k: (i, 0)),
        scratch_shapes=[
            pltpu.VMEM((tb, C, 128), jnp.float32),   # lane-wide running sum
            pltpu.VMEM((tb, C, 128), jnp.float32),   # lane-wide running max
            pltpu.VMEM((2 * tb, C), jnp.float32),    # stacked avg/max rows
        ],
        compiler_params=pltpu.CompilerParams(
            dimension_semantics=("parallel", "arbitrary"),
            vmem_limit_bytes=vmem_bytes,
        ),
        cost_estimate=cost,
    )(x_flat, w1t, w2t)

    return out.reshape(B, C, 1, 1)


def channel_attention_ref(x, w1, w2):
    """Pure-JAX reference matching the PyTorch module semantics."""
    B, C, H, W = x.shape
    xf = x.reshape(B, C, H * W).astype(jnp.float32)
    avg = jnp.mean(xf, axis=2)
    mx = jnp.max(xf, axis=2)

    def mlp(v):
        h = jnp.maximum(v @ w1.T, 0.0)
        return h @ w2.T

    out = jax.nn.sigmoid(mlp(avg) + mlp(mx))
    return out.reshape(B, C, 1, 1).astype(x.dtype)


if __name__ == "__main__":
    key = jax.random.PRNGKey(0)

    def run_case(case, B, C, H, W, reduction, t_hw):
        Cr = max(1, C // reduction)
        kx, k1, k2 = jax.random.split(jax.random.fold_in(key, case), 3)
        x = jax.random.normal(kx, (B, C, H, W), dtype=jnp.float32)
        # conv1 weight (Cr, C, 1, 1) -> (Cr, C); conv2 weight (C, Cr, 1, 1) -> (C, Cr)
        w1 = jax.random.normal(k1, (Cr, C), dtype=jnp.float32) * 0.1
        w2 = jax.random.normal(k2, (C, Cr), dtype=jnp.float32) * 0.1
        out = jax.block_until_ready(channel_attention(x, w1, w2, t_hw=t_hw))
        ref = channel_attention_ref(x, w1, w2)
        assert out.shape == (B, C, 1, 1)
        assert jnp.allclose(out, ref, atol=1e-5, rtol=1e-5), (
            case, float(jnp.max(jnp.abs(out - ref))))

    # Case 0: module defaults (in_planes=64, reduction=16). HW=256, t_hw=128 ->
    # two pipelined reduction steps on the unmasked fast path.
    run_case(0, B=2, C=64, H=16, W=16, reduction=16, t_hw=128)
    # Case 1: HW=192 not a multiple of t_hw -> exercises the pl.when-gated
    # tail-mask path, plus odd batch size and smaller channel count.
    run_case(1, B=3, C=32, H=16, W=12, reduction=8, t_hw=128)

    print("KERNEL_OK")
</pallas_src>

<mosaic_0001>
module attributes {stable_mosaic.version = 11 : i64} {
  func.func @_channel_attention_kernel(%arg0: i32, %arg1: i32, %arg2: memref<2x64x128xf32, #tpu.memory_space<vmem>>, %arg3: memref<64x4xf32, #tpu.memory_space<vmem>>, %arg4: memref<4x64xf32, #tpu.memory_space<vmem>>, %arg5: memref<2x64xf32, #tpu.memory_space<vmem>>, %arg6: memref<2x64x128xf32, #tpu.memory_space<vmem>>, %arg7: memref<2x64x128xf32, #tpu.memory_space<vmem>>, %arg8: memref<4x64xf32, #tpu.memory_space<vmem>>) attributes {dimension_semantics = [#tpu.dimension_semantics<parallel>, #tpu.dimension_semantics<arbitrary>], iteration_bounds = array<i64: 1, 2>, scalar_prefetch = 0 : i64, scratch_operands = 3 : i64, tpu.core_type = #tpu.core_type<tc>, window_params = [{transform_indices = @transform_0, window_bounds = array<i64: 2, 64, 128>}, {pipeline_mode = #tpu.pipeline_mode<synchronous>, transform_indices = @transform_1, window_bounds = array<i64: 64, 4>}, {pipeline_mode = #tpu.pipeline_mode<synchronous>, transform_indices = @transform_2, window_bounds = array<i64: 4, 64>}, {transform_indices = @transform_3, window_bounds = array<i64: 2, 64>}]} {
    %c0_i32 = arith.constant 0 : i32
    %0 = arith.cmpi eq, %arg1, %c0_i32 : i32
    %1 = arith.extui %0 : i1 to i32
    %c0_i32_0 = arith.constant 0 : i32
    %2 = arith.cmpi ne, %1, %c0_i32_0 : i32
    scf.if %2 {
      %cst = arith.constant 0.000000e+00 : f32
      %13 = vector.broadcast %cst : f32 to vector<2x64x128xf32>
      %c0_16 = arith.constant 0 : index
      %c0_17 = arith.constant 0 : index
      %c0_18 = arith.constant 0 : index
      %14 = vector.load %arg6[%c0_16, %c0_17, %c0_18] : memref<2x64x128xf32, #tpu.memory_space<vmem>>, vector<2x64x128xf32>
      tpu.vector_store %arg6[%c0_16, %c0_17, %c0_18], %13 {strides = array<i32>} : memref<2x64x128xf32, #tpu.memory_space<vmem>>, vector<2x64x128xf32>,
      %cst_19 = arith.constant 0xFF800000 : f32
      %15 = vector.broadcast %cst_19 : f32 to vector<2x64x128xf32>
      %c0_20 = arith.constant 0 : index
      %c0_21 = arith.constant 0 : index
      %c0_22 = arith.constant 0 : index
      %16 = vector.load %arg7[%c0_20, %c0_21, %c0_22] : memref<2x64x128xf32, #tpu.memory_space<vmem>>, vector<2x64x128xf32>
      tpu.vector_store %arg7[%c0_20, %c0_21, %c0_22], %15 {strides = array<i32>} : memref<2x64x128xf32, #tpu.memory_space<vmem>>, vector<2x64x128xf32>,
    } else {
    }
    %c0 = arith.constant 0 : index
    %c0_1 = arith.constant 0 : index
    %c0_2 = arith.constant 0 : index
    %3 = vector.load %arg2[%c0, %c0_1, %c0_2] : memref<2x64x128xf32, #tpu.memory_space<vmem>>, vector<2x64x128xf32>
    %c0_3 = arith.constant 0 : index
    %c0_4 = arith.constant 0 : index
    %c0_5 = arith.constant 0 : index
    %4 = vector.load %arg6[%c0_3, %c0_4, %c0_5] : memref<2x64x128xf32, #tpu.memory_space<vmem>>, vector<2x64x128xf32>
    %5 = arith.addf %4, %3 : vector<2x64x128xf32>
    %c0_6 = arith.constant 0 : index
    %c0_7 = arith.constant 0 : index
    %c0_8 = arith.constant 0 : index
    %6 = vector.load %arg6[%c0_6, %c0_7, %c0_8] : memref<2x64x128xf32, #tpu.memory_space<vmem>>, vector<2x64x128xf32>
    tpu.vector_store %arg6[%c0_6, %c0_7, %c0_8], %5 {strides = array<i32>} : memref<2x64x128xf32, #tpu.memory_space<vmem>>, vector<2x64x128xf32>,
    %c0_9 = arith.constant 0 : index
    %c0_10 = arith.constant 0 : index
    %c0_11 = arith.constant 0 : index
    %7 = vector.load %arg7[%c0_9, %c0_10, %c0_11] : memref<2x64x128xf32, #tpu.memory_space<vmem>>, vector<2x64x128xf32>
    %8 = arith.maximumf %7, %3 : vector<2x64x128xf32>
    %c0_12 = arith.constant 0 : index
    %c0_13 = arith.constant 0 : index
    %c0_14 = arith.constant 0 : index
    %9 = vector.load %arg7[%c0_12, %c0_13, %c0_14] : memref<2x64x128xf32, #tpu.memory_space<vmem>>, vector<2x64x128xf32>
    tpu.vector_store %arg7[%c0_12, %c0_13, %c0_14], %8 {strides = array<i32>} : memref<2x64x128xf32, #tpu.memory_space<vmem>>, vector<2x64x128xf32>,
    %c1_i32 = arith.constant 1 : i32
    %10 = arith.cmpi eq, %arg1, %c1_i32 : i32
    %11 = arith.extui %10 : i1 to i32
    %c0_i32_15 = arith.constant 0 : i32
    %12 = arith.cmpi ne, %11, %c0_i32_15 : i32
    scf.if %12 {
      %c0_16 = arith.constant 0 : index
      %c0_17 = arith.constant 0 : index
      %c0_18 = arith.constant 0 : index
      %13 = vector.load %arg6[%c0_16, %c0_17, %c0_18] : memref<2x64x128xf32, #tpu.memory_space<vmem>>, vector<2x64x128xf32>
      %cst = arith.constant dense<0.000000e+00> : vector<2x64xf32>
      %14 = vector.multi_reduction <add>, %13, %cst [2] : vector<2x64x128xf32> to vector<2x64xf32>
      %cst_19 = arith.constant 2.560000e+02 : f32
      %15 = vector.broadcast %cst_19 : f32 to vector<2x64xf32>
      %16 = arith.divf %14, %15 : vector<2x64xf32>
      %c0_20 = arith.constant 0 : index
      %c0_21 = arith.constant 0 : index
      %c0_22 = arith.constant 0 : index
      %17 = vector.load %arg7[%c0_20, %c0_21, %c0_22] : memref<2x64x128xf32, #tpu.memory_space<vmem>>, vector<2x64x128xf32>
      %cst_23 = arith.constant dense<0xFF800000> : vector<2x64xf32>
      %18 = vector.multi_reduction <maximumf>, %17, %cst_23 [2] : vector<2x64x128xf32> to vector<2x64xf32>
      %c0_24 = arith.constant 0 : index
      %c0_25 = arith.constant 0 : index
      %19 = vector.load %arg8[%c0_24, %c0_25] : memref<4x64xf32, #tpu.memory_space<vmem>>, vector<2x64xf32>
      tpu.vector_store %arg8[%c0_24, %c0_25], %16 {strides = array<i32>} : memref<4x64xf32, #tpu.memory_space<vmem>>, vector<2x64xf32>,
      %c2 = arith.constant 2 : index
      %c0_26 = arith.constant 0 : index
      %20 = vector.load %arg8[%c2, %c0_26] : memref<4x64xf32, #tpu.memory_space<vmem>>, vector<2x64xf32>
      tpu.vector_store %arg8[%c2, %c0_26], %18 {strides = array<i32>} : memref<4x64xf32, #tpu.memory_space<vmem>>, vector<2x64xf32>,
      %c0_27 = arith.constant 0 : index
      %c0_28 = arith.constant 0 : index
      %21 = vector.load %arg8[%c0_27, %c0_28] : memref<4x64xf32, #tpu.memory_space<vmem>>, vector<4x64xf32>
      %c0_29 = arith.constant 0 : index
      %c0_30 = arith.constant 0 : index
      %22 = vector.load %arg3[%c0_29, %c0_30] : memref<64x4xf32, #tpu.memory_space<vmem>>, vector<64x4xf32>
      %cst_31 = arith.constant dense<0.000000e+00> : vector<4x4xf32>
      %23 = tpu.matmul %21, %22, %cst_31 {dimension_numbers = #tpu.dot_dimension_numbers<[1], [0], [0], [1], [0, 0, 1, 1], [], []>} : vector<4x64xf32>, vector<64x4xf32>, vector<4x4xf32> -> vector<4x4xf32>
      %cst_32 = arith.constant 0.000000e+00 : f32
      %24 = vector.broadcast %cst_32 : f32 to vector<4x4xf32>
      %25 = arith.maximumf %23, %24 : vector<4x4xf32>
      %c0_33 = arith.constant 0 : index
      %c0_34 = arith.constant 0 : index
      %26 = vector.load %arg4[%c0_33, %c0_34] : memref<4x64xf32, #tpu.memory_space<vmem>>, vector<4x64xf32>
      %cst_35 = arith.constant dense<0.000000e+00> : vector<4x64xf32>
      %27 = tpu.matmul %25, %26, %cst_35 {dimension_numbers = #tpu.dot_dimension_numbers<[1], [0], [0], [1], [0, 0, 1, 1], [], []>} : vector<4x4xf32>, vector<4x64xf32>, vector<4x64xf32> -> vector<4x64xf32>
      %28 = vector.extract_strided_slice %27 {offsets = [0, 0], sizes = [2, 64], strides = [1, 1]} : vector<4x64xf32> to vector<2x64xf32>
      %29 = vector.extract_strided_slice %27 {offsets = [2, 0], sizes = [2, 64], strides = [1, 1]} : vector<4x64xf32> to vector<2x64xf32>
      %30 = arith.addf %28, %29 : vector<2x64xf32>
      %31 = arith.negf %30 : vector<2x64xf32>
      %32 = math.exp %31 : vector<2x64xf32>
      %cst_36 = arith.constant 1.000000e+00 : f32
      %33 = vector.broadcast %cst_36 : f32 to vector<2x64xf32>
      %34 = arith.addf %33, %32 : vector<2x64xf32>
      %35 = arith.divf %33, %34 : vector<2x64xf32>
      %c0_37 = arith.constant 0 : index
      %c0_38 = arith.constant 0 : index
      %36 = vector.load %arg5[%c0_37, %c0_38] : memref<2x64xf32, #tpu.memory_space<vmem>>, vector<2x64xf32>
      tpu.vector_store %arg5[%c0_37, %c0_38], %35 {strides = array<i32>} : memref<2x64xf32, #tpu.memory_space<vmem>>, vector<2x64xf32>,
    } else {
    }
    return
  }
  func.func @transform_0(%arg0: i32, %arg1: i32) -> (i32, i32, i32) {
    %c0_i32 = arith.constant 0 : i32
    %c0_i32_0 = arith.constant 0 : i32
    return %arg0, %c0_i32, %arg1 : i32, i32, i32
  }
  func.func @transform_1(%arg0: i32, %arg1: i32) -> (i32, i32) {
    %c0_i32 = arith.constant 0 : i32
    %c0_i32_0 = arith.constant 0 : i32
    %c0_i32_1 = arith.constant 0 : i32
    return %c0_i32, %c0_i32_0 : i32, i32
  }
  func.func @transform_2(%arg0: i32, %arg1: i32) -> (i32, i32) {
    %c0_i32 = arith.constant 0 : i32
    %c0_i32_0 = arith.constant 0 : i32
    %c0_i32_1 = arith.constant 0 : i32
    return %c0_i32, %c0_i32_0 : i32, i32
  }
  func.func @transform_3(%arg0: i32, %arg1: i32) -> (i32, i32) {
    %c0_i32 = arith.constant 0 : i32
    %c0_i32_0 = arith.constant 0 : i32
    return %arg0, %c0_i32 : i32, i32
  }
}

</mosaic_0001>

<llo_original>
// kernel: tpu_custom_call.1
$region0: #{tpu_custom_call.1}
  #allocation0 [shape = 'u32[]', space=smem, size = 0x4, offset = 0x4, fixed_abs, tag = 'smem constant byte address 0x4 - core index']
  #allocation1 [shape = 'u32[144,128]{1,0:T(1,128)}', space=vmem, size = 0x12000, scoped, tag = 'internal scratch']
  #allocation2 [shape = 'f32[2,64,128]{2,1,0:T(8,128)}', space=vmem, size = 0x10000, scoped, tag = 'scratch operand']
  #allocation3 [shape = 'f32[2,64,128]{2,1,0:T(8,128)}', space=vmem, size = 0x10000, scoped, tag = 'scratch operand']
  #allocation4 [shape = 'f32[4,64]{1,0:T(4,128)}', space=vmem, size = 0x800, scoped, tag = 'scratch operand']
  %s0 = inlined_call_operand.hbm [shape: f32[2,64,256], index: 0, kind: input, shape index: {}]
  %s1 = inlined_call_operand.vmem [shape: f32[64,4], index: 1, kind: input, shape index: {}]
  %s2 = inlined_call_operand.vmem [shape: f32[4,64], index: 2, kind: input, shape index: {}]
  %s3 = inlined_call_operand.hbm [shape: f32[2,64], index: 3, kind: output, shape index: {}]
  %s4 = sld [smem:[#allocation0]]
  $region57: #{tpu_custom_call.1} parent=0
    _
  %s6 = ssub.s32 1, %s4
  %s7 = scalar_select 0, %s6, %s4
  $region1: #{tpu_custom_call.1} parent=0
    #allocation5 [shape = 'u8[131072]{0}', space=vmem, size = 0x20000, scoped, tag = 'input window, operand 0']
    #allocation6 [shape = 's32[2]{0}', space=sflag, size = 0x8, scoped, tag = 'scoped memory for tpu_custom_call.1']
    #allocation7 [shape = 's32[2]{0}', space=sflag, size = 0x8, scoped, tag = 'scoped memory for tpu_custom_call.1']
    #allocation8 [shape = 'u8[1024]{0}', space=vmem, size = 0x400, scoped, tag = 'output window, operand 0, single buffered']
    %8 = vsyncpa [#allocation6], 0
    %s9 = scalar_lea.sflag [#allocation6], 1
    %10 = vsyncpa %s9, 0
    %11 = vsyncpa [#allocation7], 0
    loop: start=0, step=1, limit=4
    $region2: #{tpu_custom_call.1} parent=1 // loop_pre_header
      _
    $region3: #{tpu_custom_call.1} parent=1 // loop_header
      %s13 = sphi 0, %s17
      %p14 = scmp.ge.s32.totalorder %s13, 4
      %s20 = sphi 0, %s32
      %s21 = sphi 0, %s28
      %s22 = sphi 0, %s20
      %s23 = sphi 0, %s21
      %s24 = sphi 0, %s22
      %s25 = sphi 0, %s23
      %s37 = sphi 0, %s39
      %s40 = sphi 0, %s37
      %s41 = sphi 0, %s40
      %s57 = sphi 0, %s41
      %s61 = sphi 0, %s61
      %s63 = sphi 0, %s61
      %s64 = sphi 0, %s63
      %s78 = sphi 0, %s64
      %s82 = sphi 0, %s82
      %s84 = sphi 0, %s82
      %s85 = sphi 0, %s84
      %s99 = sphi 0, %s85
      %s105 = sphi 0, %s107
      %s108 = sphi 0, %s105
      %s109 = sphi 0, %s108
      %s125 = sphi 0, %s109
    $region4: #{tpu_custom_call.1} parent=1 // loop_header_branch
      %16 = sbr.rel (%p14) target = $region8
    $region5: #{tpu_custom_call.1} parent=1 // loop_body
      %s18 = ssub.s32 %s13, 1
      %s19 = ssub.s32 %s13, 2
      %s26 = sadd.s32 1, %s21
      %p27 = scmp.ge.s32.totalorder %s26, 2
      %s28 = scalar_select %p27, 0, %s26
      %s29 = sadd.s32 1, %s20
      %s30 = scalar_select %p27, %s29, %s20
      %p31 = scmp.ge.s32.totalorder %s30, 1
      %s32 = scalar_select %p31, 0, %s30
      %s33 = ssub.s32 %s20, %s32
      %s34 = ssub.s32 %s21, %s28
      %s35 = sor.u32 %s33, %s34
      %p36 = scmp.eq.s32.totalorder %s35, 0
      %s38 = sadd.s32 %s37, 1
      %s39 = scalar_select %p36, %s37, %s38
      %p42 = pneg %p36
      %p43 = scmp.eq.s32.totalorder %s13, 1
      %p44 = por %p42, %p43
      %p45 = scmp.ne.s32.totalorder %s37, %s40
      %p46 = scmp.eq.s32.totalorder %s13, 0
      %p47 = por %p45, %p46
      %p48 = scmp.ne.s32.totalorder %s37, %s40
      %p49 = scmp.eq.s32.totalorder %s18, 1
      %p50 = por %p48, %p49
      %p51 = scmp.ne.s32.totalorder %s40, %s41
      %p52 = scmp.eq.s32.totalorder %s18, 0
      %p53 = por %p51, %p52
      %p54 = scmp.ne.s32.totalorder %s40, %s41
      %p55 = scmp.eq.s32.totalorder %s19, 1
      %p56 = por %p54, %p55
      %p58 = scmp.ne.s32.totalorder %s41, %s57
      %p59 = scmp.eq.s32.totalorder %s19, 0
      %p60 = por %p58, %p59
      %s62 = sadd.s32 %s61, 1
      %p65 = scmp.eq.s32.totalorder %s13, 1
      %p66 = scmp.ne.s32.totalorder %s61, %s63
      %p67 = scmp.eq.s32.totalorder %s13, 0
      %p68 = por %p66, %p67
      %p69 = scmp.ne.s32.totalorder %s61, %s63
      %p70 = scmp.eq.s32.totalorder %s18, 1
      %p71 = por %p69, %p70
      %p72 = scmp.ne.s32.totalorder %s63, %s64
      %p73 = scmp.eq.s32.totalorder %s18, 0
      %p74 = por %p72, %p73
      %p75 = scmp.ne.s32.totalorder %s63, %s64
      %p76 = scmp.eq.s32.totalorder %s19, 1
      %p77 = por %p75, %p76
      %p79 = scmp.ne.s32.totalorder %s64, %s78
      %p80 = scmp.eq.s32.totalorder %s19, 0
      %p81 = por %p79, %p80
      %s83 = sadd.s32 %s82, 1
      %p86 = scmp.eq.s32.totalorder %s13, 1
      %p87 = scmp.ne.s32.totalorder %s82, %s84
      %p88 = scmp.eq.s32.totalorder %s13, 0
      %p89 = por %p87, %p88
      %p90 = scmp.ne.s32.totalorder %s82, %s84
      %p91 = scmp.eq.s32.totalorder %s18, 1
      %p92 = por %p90, %p91
      %p93 = scmp.ne.s32.totalorder %s84, %s85
      %p94 = scmp.eq.s32.totalorder %s18, 0
      %p95 = por %p93, %p94
      %p96 = scmp.ne.s32.totalorder %s84, %s85
      %p97 = scmp.eq.s32.totalorder %s19, 1
      %p98 = por %p96, %p97
      %p100 = scmp.ne.s32.totalorder %s85, %s99
      %p101 = scmp.eq.s32.totalorder %s19, 0
      %p102 = por %p100, %p101
      %s103 = ssub.s32 %s20, %s32
      %p104 = scmp.eq.s32.totalorder %s103, 0
      %s106 = sadd.s32 %s105, 1
      %s107 = scalar_select %p104, %s105, %s106
      %p110 = pneg %p104
      %p111 = scmp.eq.s32.totalorder %s13, 1
      %p112 = por %p110, %p111
      %p113 = scmp.ne.s32.totalorder %s105, %s108
      %p114 = scmp.eq.s32.totalorder %s13, 0
      %p115 = por %p113, %p114
      %p116 = scmp.ne.s32.totalorder %s105, %s108
      %p117 = scmp.eq.s32.totalorder %s18, 1
      %p118 = por %p116, %p117
      %p119 = scmp.ne.s32.totalorder %s108, %s109
      %p120 = scmp.eq.s32.totalorder %s18, 0
      %p121 = por %p119, %p120
      %p122 = scmp.ne.s32.totalorder %s108, %s109
      %p123 = scmp.eq.s32.totalorder %s19, 1
      %p124 = por %p122, %p123
      %p126 = scmp.ne.s32.totalorder %s109, %s125
      %p127 = scmp.eq.s32.totalorder %s19, 0
      %p128 = por %p126, %p127
      %p129 = scmp.le.s32.totalorder 1, %s13
      %p130 = scmp.lt.s32.totalorder %s13, 3
      %p131 = pnand %p129, %p130
      %p132 = pneg %p131
      // Predicated region
      $region9: #{tpu_custom_call.1} parent=5 // pred_check
        _
      $region10: #{tpu_custom_call.1} parent=5 // pred_check_branch
        %134 = sbr.rel (%p131) target = $region12
      $region11: #{tpu_custom_call.1} parent=5 // pred_region
        %s135 = ssub.s32 %s13, 1
        // Predicated region
        $region13: #{tpu_custom_call.1} parent=11 // pred_check
          %p136 = pneg %p74
        $region14: #{tpu_custom_call.1} parent=11 // pred_check_branch
          %138 = sbr.rel (%p136) target = $region16
        $region15: #{tpu_custom_call.1} parent=11 // pred_region
          _
        $region16: #{tpu_custom_call.1} parent=11 // pred_fallthru
          _
        // Predicated region
        $region17: #{tpu_custom_call.1} parent=11 // pred_check
          %p139 = pneg %p95
        $region18: #{tpu_custom_call.1} parent=11 // pred_check_branch
          %141 = sbr.rel (%p139) target = $region20
        $region19: #{tpu_custom_call.1} parent=11 // pred_region
          _
        $region20: #{tpu_custom_call.1} parent=11 // pred_fallthru
          _
      $region12: #{tpu_custom_call.1} parent=5 // pred_fallthru
        _
      %p142 = scmp.lt.s32.totalorder %s13, 2
      // Predicated region
      $region21: #{tpu_custom_call.1} parent=5 // pred_check
        %p143 = pneg %p142
      $region22: #{tpu_custom_call.1} parent=5 // pred_check_branch
        %145 = sbr.rel (%p143) target = $region24
      $region23: #{tpu_custom_call.1} parent=5 // pred_region
        // Predicated region
        $region25: #{tpu_custom_call.1} parent=23 // pred_check
          %p146 = pneg %p47
        $region26: #{tpu_custom_call.1} parent=23 // pred_check_branch
          %148 = sbr.rel (%p146) target = $region28
        $region27: #{tpu_custom_call.1} parent=23 // pred_region
          %s149 = sand.u32 %s37, 1
          %s150 = scalar_lea.sflag [#allocation6], %s149
          %s151 = sand.u32 %s37, 1
          %s152 = smul.addr %s151, 128
          %s153 = scalar_lea.vmem [#allocation5], %s152
          %s154 = smul.u32 2, %s20
          %s156 = ssub.s32 2048, 2048
          %157 = vsyncadd %s150, %s156
          %s158 = smul.addr %s154, 16
          %s159 = sadd.s32 %s21, %s158
          %s160 = smul.addr %s159, 128
          %s161 = scalar_lea.hbm %s0, %s160
          %s162 = sshll.u32 %s153, 4
          %s163 = int_to_ptr.vmem [resolvable:$true] %s162
          %168 = dma.hbm_to_vmem [thread:$0]  %s161, 2048, %s163, %s150, 256, 128, 8
        $region28: #{tpu_custom_call.1} parent=23 // pred_fallthru
          _
      $region24: #{tpu_custom_call.1} parent=5 // pred_fallthru
        _
      %p169 = scmp.le.s32.totalorder 1, %s13
      %p170 = scmp.lt.s32.totalorder %s13, 3
      %p171 = pnand %p169, %p170
      %p172 = pneg %p171
      // Predicated region
      $region29: #{tpu_custom_call.1} parent=5 // pred_check
        _
      $region30: #{tpu_custom_call.1} parent=5 // pred_check_branch
        %174 = sbr.rel (%p171) target = $region32
      $region31: #{tpu_custom_call.1} parent=5 // pred_region
        %s175 = ssub.s32 %s13, 1
        %s176 = sand.u32 %s40, 1
        %s177 = scalar_lea.sflag [#allocation6], %s176
        %s178 = sand.u32 %s40, 1
        %s179 = smul.addr %s178, 128
        %s180 = scalar_lea.vmem [#allocation5], %s179
        // Predicated region
        $region33: #{tpu_custom_call.1} parent=31 // pred_check
          %p181 = pneg %p53
        $region34: #{tpu_custom_call.1} parent=31 // pred_check_branch
          %183 = sbr.rel (%p181) target = $region36
        $region35: #{tpu_custom_call.1} parent=31 // pred_region
          %184 = dma.done %s177, 2048
        $region36: #{tpu_custom_call.1} parent=31 // pred_fallthru
          _
        %s185 = sand.u32 %s40, 1
        %s186 = scalar_lea.sflag [#allocation6], %s185
        %s187 = sand.u32 %s40, 1
        %s188 = smul.addr %s187, 128
        %s189 = scalar_lea.vmem [#allocation5], %s188
        %p190 = pneg %p53
        %p191 = pneg %p50
        %p192 = pneg %p74
        %p193 = pneg %p71
        %p194 = pneg %p95
        %p195 = pneg %p92
        %p196 = pneg %p121
        %p197 = pneg %p118
        %s198 = smul.u32 2, %s22
        %p199 = scmp.eq.s32.totalorder %s23, 0
        // Predicated region
        $region37: #{tpu_custom_call.1} parent=31 // pred_check
          %p200 = pneg %p199
        $region38: #{tpu_custom_call.1} parent=31 // pred_check_branch
          %202 = sbr.rel (%p200) target = $region40
        $region39: #{tpu_custom_call.1} parent=31 // pred_region
          %203 = vst [vmem:[#allocation2] sm:$0xff] 0.0
          %204 = vst [vmem:[#allocation2 + $0x8] sm:$0xff] 0.0
          %205 = vst [vmem:[#allocation2 + $0x10] sm:$0xff] 0.0
          %206 = vst [vmem:[#allocation2 + $0x18] sm:$0xff] 0.0
          %207 = vst [vmem:[#allocation2 + $0x20] sm:$0xff] 0.0
          %208 = vst [vmem:[#allocation2 + $0x28] sm:$0xff] 0.0
          %209 = vst [vmem:[#allocation2 + $0x30] sm:$0xff] 0.0
          %210 = vst [vmem:[#allocation2 + $0x38] sm:$0xff] 0.0
          %211 = vst [vmem:[#allocation2 + $0x40] sm:$0xff] 0.0
          %212 = vst [vmem:[#allocation2 + $0x48] sm:$0xff] 0.0
          %213 = vst [vmem:[#allocation2 + $0x50] sm:$0xff] 0.0
          %214 = vst [vmem:[#allocation2 + $0x58] sm:$0xff] 0.0
          %215 = vst [vmem:[#allocation2 + $0x60] sm:$0xff] 0.0
          %216 = vst [vmem:[#allocation2 + $0x68] sm:$0xff] 0.0
          %217 = vst [vmem:[#allocation2 + $0x70] sm:$0xff] 0.0
          %218 = vst [vmem:[#allocation2 + $0x78] sm:$0xff] 0.0
          %219 = vst [vmem:[#allocation3] sm:$0xff] -inf
          %220 = vst [vmem:[#allocation3 + $0x8] sm:$0xff] -inf
          %221 = vst [vmem:[#allocation3 + $0x10] sm:$0xff] -inf
          %222 = vst [vmem:[#allocation3 + $0x18] sm:$0xff] -inf
          %223 = vst [vmem:[#allocation3 + $0x20] sm:$0xff] -inf
          %224 = vst [vmem:[#allocation3 + $0x28] sm:$0xff] -inf
          %225 = vst [vmem:[#allocation3 + $0x30] sm:$0xff] -inf
          %226 = vst [vmem:[#allocation3 + $0x38] sm:$0xff] -inf
          %227 = vst [vmem:[#allocation3 + $0x40] sm:$0xff] -inf
          %228 = vst [vmem:[#allocation3 + $0x48] sm:$0xff] -inf
          %229 = vst [vmem:[#allocation3 + $0x50] sm:$0xff] -inf
          %230 = vst [vmem:[#allocation3 + $0x58] sm:$0xff] -inf
          %231 = vst [vmem:[#allocation3 + $0x60] sm:$0xff] -inf
          %232 = vst [vmem:[#allocation3 + $0x68] sm:$0xff] -inf
          %233 = vst [vmem:[#allocation3 + $0x70] sm:$0xff] -inf
          %234 = vst [vmem:[#allocation3 + $0x78] sm:$0xff] -inf
        $region40: #{tpu_custom_call.1} parent=31 // pred_fallthru
          _
        %v235 = vld [vmem:[%s180] sm:$0xff]
        %v236 = vld [vmem:[%s180 + $0x8] sm:$0xff]
        %v237 = vld [vmem:[%s180 + $0x10] sm:$0xff]
        %v238 = vld [vmem:[%s180 + $0x18] sm:$0xff]
        %v239 = vld [vmem:[%s180 + $0x20] sm:$0xff]
        %v240 = vld [vmem:[%s180 + $0x28] sm:$0xff]
        %v241 = vld [vmem:[%s180 + $0x30] sm:$0xff]
        %v242 = vld [vmem:[%s180 + $0x38] sm:$0xff]
        %v243 = vld [vmem:[%s180 + $0x40] sm:$0xff]
        %v244 = vld [vmem:[%s180 + $0x48] sm:$0xff]
        %v245 = vld [vmem:[%s180 + $0x50] sm:$0xff]
        %v246 = vld [vmem:[%s180 + $0x58] sm:$0xff]
        %v247 = vld [vmem:[%s180 + $0x60] sm:$0xff]
        %v248 = vld [vmem:[%s180 + $0x68] sm:$0xff]
        %v249 = vld [vmem:[%s180 + $0x70] sm:$0xff]
        %v250 = vld [vmem:[%s180 + $0x78] sm:$0xff]
        %v251 = vld [vmem:[#allocation2] sm:$0xff]
        %v252 = vld [vmem:[#allocation2 + $0x8] sm:$0xff]
        %v253 = vld [vmem:[#allocation2 + $0x10] sm:$0xff]
        %v254 = vld [vmem:[#allocation2 + $0x18] sm:$0xff]
        %v255 = vld [vmem:[#allocation2 + $0x20] sm:$0xff]
        %v256 = vld [vmem:[#allocation2 + $0x28] sm:$0xff]
        %v257 = vld [vmem:[#allocation2 + $0x30] sm:$0xff]
        %v258 = vld [vmem:[#allocation2 + $0x38] sm:$0xff]
        %v259 = vld [vmem:[#allocation2 + $0x40] sm:$0xff]
        %v260 = vld [vmem:[#allocation2 + $0x48] sm:$0xff]
        %v261 = vld [vmem:[#allocation2 + $0x50] sm:$0xff]
        %v262 = vld [vmem:[#allocation2 + $0x58] sm:$0xff]
        %v263 = vld [vmem:[#allocation2 + $0x60] sm:$0xff]
        %v264 = vld [vmem:[#allocation2 + $0x68] sm:$0xff]
        %v265 = vld [vmem:[#allocation2 + $0x70] sm:$0xff]
        %v266 = vld [vmem:[#allocation2 + $0x78] sm:$0xff]
        %v267 = vadd.f32 %v251, %v235
        %v268 = vadd.f32 %v252, %v236
        %v269 = vadd.f32 %v253, %v237
        %v270 = vadd.f32 %v254, %v238
        %v271 = vadd.f32 %v255, %v239
        %v272 = vadd.f32 %v256, %v240
        %v273 = vadd.f32 %v257, %v241
        %v274 = vadd.f32 %v258, %v242
        %v275 = vadd.f32 %v259, %v243
        %v276 = vadd.f32 %v260, %v244
        %v277 = vadd.f32 %v261, %v245
        %v278 = vadd.f32 %v262, %v246
        %v279 = vadd.f32 %v263, %v247
        %v280 = vadd.f32 %v264, %v248
        %v281 = vadd.f32 %v265, %v249
        %v282 = vadd.f32 %v266, %v250
        %283 = vst [vmem:[#allocation2] sm:$0xff] %v267
        %284 = vst [vmem:[#allocation2 + $0x8] sm:$0xff] %v268
        %285 = vst [vmem:[#allocation2 + $0x10] sm:$0xff] %v269
        %286 = vst [vmem:[#allocation2 + $0x18] sm:$0xff] %v270
        %287 = vst [vmem:[#allocation2 + $0x20] sm:$0xff] %v271
        %288 = vst [vmem:[#allocation2 + $0x28] sm:$0xff] %v272
        %289 = vst [vmem:[#allocation2 + $0x30] sm:$0xff] %v273
        %290 = vst [vmem:[#allocation2 + $0x38] sm:$0xff] %v274
        %291 = vst [vmem:[#allocation2 + $0x40] sm:$0xff] %v275
        %292 = vst [vmem:[#allocation2 + $0x48] sm:$0xff] %v276
        %293 = vst [vmem:[#allocation2 + $0x50] sm:$0xff] %v277
        %294 = vst [vmem:[#allocation2 + $0x58] sm:$0xff] %v278
        %295 = vst [vmem:[#allocation2 + $0x60] sm:$0xff] %v279
        %296 = vst [vmem:[#allocation2 + $0x68] sm:$0xff] %v280
        %297 = vst [vmem:[#allocation2 + $0x70] sm:$0xff] %v281
        %298 = vst [vmem:[#allocation2 + $0x78] sm:$0xff] %v282
        %v299 = vld [vmem:[#allocation3] sm:$0xff]
        %v300 = vld [vmem:[#allocation3 + $0x8] sm:$0xff]
        %v301 = vld [vmem:[#allocation3 + $0x10] sm:$0xff]
        %v302 = vld [vmem:[#allocation3 + $0x18] sm:$0xff]
        %v303 = vld [vmem:[#allocation3 + $0x20] sm:$0xff]
        %v304 = vld [vmem:[#allocation3 + $0x28] sm:$0xff]
        %v305 = vld [vmem:[#allocation3 + $0x30] sm:$0xff]
        %v306 = vld [vmem:[#allocation3 + $0x38] sm:$0xff]
        %v307 = vld [vmem:[#allocation3 + $0x40] sm:$0xff]
        %v308 = vld [vmem:[#allocation3 + $0x48] sm:$0xff]
        %v309 = vld [vmem:[#allocation3 + $0x50] sm:$0xff]
        %v310 = vld [vmem:[#allocation3 + $0x58] sm:$0xff]
        %v311 = vld [vmem:[#allocation3 + $0x60] sm:$0xff]
        %v312 = vld [vmem:[#allocation3 + $0x68] sm:$0xff]
        %v313 = vld [vmem:[#allocation3 + $0x70] sm:$0xff]
        %v314 = vld [vmem:[#allocation3 + $0x78] sm:$0xff]
        %v315 = vmax.f32 %v299, %v235
        %v316 = vmax.f32 %v300, %v236
        %v317 = vmax.f32 %v301, %v237
        %v318 = vmax.f32 %v302, %v238
        %v319 = vmax.f32 %v303, %v239
        %v320 = vmax.f32 %v304, %v240
        %v321 = vmax.f32 %v305, %v241
        %v322 = vmax.f32 %v306, %v242
        %v323 = vmax.f32 %v307, %v243
        %v324 = vmax.f32 %v308, %v244
        %v325 = vmax.f32 %v309, %v245
        %v326 = vmax.f32 %v310, %v246
        %v327 = vmax.f32 %v311, %v247
        %v328 = vmax.f32 %v312, %v248
        %v329 = vmax.f32 %v313, %v249
        %v330 = vmax.f32 %v314, %v250
        %331 = vst [vmem:[#allocation3] sm:$0xff] %v315
        %332 = vst [vmem:[#allocation3 + $0x8] sm:$0xff] %v316
        %333 = vst [vmem:[#allocation3 + $0x10] sm:$0xff] %v317
        %334 = vst [vmem:[#allocation3 + $0x18] sm:$0xff] %v318
        %335 = vst [vmem:[#allocation3 + $0x20] sm:$0xff] %v319
        %336 = vst [vmem:[#allocation3 + $0x28] sm:$0xff] %v320
        %337 = vst [vmem:[#allocation3 + $0x30] sm:$0xff] %v321
        %338 = vst [vmem:[#allocation3 + $0x38] sm:$0xff] %v322
        %339 = vst [vmem:[#allocation3 + $0x40] sm:$0xff] %v323
        %340 = vst [vmem:[#allocation3 + $0x48] sm:$0xff] %v324
        %341 = vst [vmem:[#allocation3 + $0x50] sm:$0xff] %v325
        %342 = vst [vmem:[#allocation3 + $0x58] sm:$0xff] %v326
        %343 = vst [vmem:[#allocation3 + $0x60] sm:$0xff] %v327
        %344 = vst [vmem:[#allocation3 + $0x68] sm:$0xff] %v328
        %345 = vst [vmem:[#allocation3 + $0x70] sm:$0xff] %v329
        %346 = vst [vmem:[#allocation3 + $0x78] sm:$0xff] %v330
        %p347 = scmp.eq.s32.totalorder %s23, 1
        // Predicated region
        $region41: #{tpu_custom_call.1} parent=31 // pred_check
          %p348 = pneg %p347
        $region42: #{tpu_custom_call.1} parent=31 // pred_check_branch
          %350 = sbr.rel (%p348) target = $region44
        $region43: #{tpu_custom_call.1} parent=31 // pred_region
          %v351 = vld [vmem:[#allocation2] sm:$0xff]
          %v352 = vld [vmem:[#allocation2 + $0x8] sm:$0xff]
          %v353 = vld [vmem:[#allocation2 + $0x10] sm:$0xff]
          %v354 = vld [vmem:[#allocation2 + $0x18] sm:$0xff]
          %v355 = vld [vmem:[#allocation2 + $0x20] sm:$0xff]
          %v356 = vld [vmem:[#allocation2 + $0x28] sm:$0xff]
          %v357 = vld [vmem:[#allocation2 + $0x30] sm:$0xff]
          %v358 = vld [vmem:[#allocation2 + $0x38] sm:$0xff]
          %v359 = vld [vmem:[#allocation2 + $0x40] sm:$0xff]
          %v360 = vld [vmem:[#allocation2 + $0x48] sm:$0xff]
          %v361 = vld [vmem:[#allocation2 + $0x50] sm:$0xff]
          %v362 = vld [vmem:[#allocation2 + $0x58] sm:$0xff]
          %v363 = vld [vmem:[#allocation2 + $0x60] sm:$0xff]
          %v364 = vld [vmem:[#allocation2 + $0x68] sm:$0xff]
          %v365 = vld [vmem:[#allocation2 + $0x70] sm:$0xff]
          %v366 = vld [vmem:[#allocation2 + $0x78] sm:$0xff]
          %367 = vadd.xlane.f32.xlu0 %v351
          %v368 = vpop.xlane.xlu0 %367
          %369 = vadd.xlane.f32.xlu0 %v352
          %v370 = vpop.xlane.xlu0 %369
          %371 = vadd.xlane.f32.xlu0 %v353
          %v372 = vpop.xlane.xlu0 %371
          %373 = vadd.xlane.f32.xlu0 %v354
          %v374 = vpop.xlane.xlu0 %373
          %375 = vadd.xlane.f32.xlu0 %v355
          %v376 = vpop.xlane.xlu0 %375
          %377 = vadd.xlane.f32.xlu0 %v356
          %v378 = vpop.xlane.xlu0 %377
          %379 = vadd.xlane.f32.xlu0 %v357
          %v380 = vpop.xlane.xlu0 %379
          %381 = vadd.xlane.f32.xlu0 %v358
          %v382 = vpop.xlane.xlu0 %381
          %383 = vadd.xlane.f32.xlu0 %v359
          %v384 = vpop.xlane.xlu0 %383
          %385 = vadd.xlane.f32.xlu0 %v360
          %v386 = vpop.xlane.xlu0 %385
          %387 = vadd.xlane.f32.xlu0 %v361
          %v388 = vpop.xlane.xlu0 %387
          %389 = vadd.xlane.f32.xlu0 %v362
          %v390 = vpop.xlane.xlu0 %389
          %391 = vadd.xlane.f32.xlu0 %v363
          %v392 = vpop.xlane.xlu0 %391
          %393 = vadd.xlane.f32.xlu0 %v364
          %v394 = vpop.xlane.xlu0 %393
          %395 = vadd.xlane.f32.xlu0 %v365
          %v396 = vpop.xlane.xlu0 %395
          %397 = vadd.xlane.f32.xlu0 %v366
          %v398 = vpop.xlane.xlu0 %397
          %v399 = vrcp.pop 256.0
          %v400 = vmul.f32 %v368, %v399
          %v401 = vmul.f32 %v370, %v399
          %v402 = vmul.f32 %v372, %v399
          %v403 = vmul.f32 %v374, %v399
          %v404 = vmul.f32 %v376, %v399
          %v405 = vmul.f32 %v378, %v399
          %v406 = vmul.f32 %v380, %v399
          %v407 = vmul.f32 %v382, %v399
          %v408 = vmul.f32 %v384, %v399
          %v409 = vmul.f32 %v386, %v399
          %v410 = vmul.f32 %v388, %v399
          %v411 = vmul.f32 %v390, %v399
          %v412 = vmul.f32 %v392, %v399
          %v413 = vmul.f32 %v394, %v399
          %v414 = vmul.f32 %v396, %v399
          %v415 = vmul.f32 %v398, %v399
          %v416 = vld [vmem:[#allocation3] sm:$0xff]
          %v417 = vld [vmem:[#allocation3 + $0x8] sm:$0xff]
          %v418 = vld [vmem:[#allocation3 + $0x10] sm:$0xff]
          %v419 = vld [vmem:[#allocation3 + $0x18] sm:$0xff]
          %v420 = vld [vmem:[#allocation3 + $0x20] sm:$0xff]
          %v421 = vld [vmem:[#allocation3 + $0x28] sm:$0xff]
          %v422 = vld [vmem:[#allocation3 + $0x30] sm:$0xff]
          %v423 = vld [vmem:[#allocation3 + $0x38] sm:$0xff]
          %v424 = vld [vmem:[#allocation3 + $0x40] sm:$0xff]
          %v425 = vld [vmem:[#allocation3 + $0x48] sm:$0xff]
          %v426 = vld [vmem:[#allocation3 + $0x50] sm:$0xff]
          %v427 = vld [vmem:[#allocation3 + $0x58] sm:$0xff]
          %v428 = vld [vmem:[#allocation3 + $0x60] sm:$0xff]
          %v429 = vld [vmem:[#allocation3 + $0x68] sm:$0xff]
          %v430 = vld [vmem:[#allocation3 + $0x70] sm:$0xff]
          %v431 = vld [vmem:[#allocation3 + $0x78] sm:$0xff]
          %432 = vmax.xlane.f32.xlu0 %v416
          %v433 = vpop.xlane.xlu0 %432
          %434 = vmax.xlane.f32.xlu0 %v417
          %v435 = vpop.xlane.xlu0 %434
          %436 = vmax.xlane.f32.xlu0 %v418
          %v437 = vpop.xlane.xlu0 %436
          %438 = vmax.xlane.f32.xlu0 %v419
          %v439 = vpop.xlane.xlu0 %438
          %440 = vmax.xlane.f32.xlu0 %v420
          %v441 = vpop.xlane.xlu0 %440
          %442 = vmax.xlane.f32.xlu0 %v421
          %v443 = vpop.xlane.xlu0 %442
          %444 = vmax.xlane.f32.xlu0 %v422
          %v445 = vpop.xlane.xlu0 %444
          %446 = vmax.xlane.f32.xlu0 %v423
          %v447 = vpop.xlane.xlu0 %446
          %448 = vmax.xlane.f32.xlu0 %v424
          %v449 = vpop.xlane.xlu0 %448
          %450 = vmax.xlane.f32.xlu0 %v425
          %v451 = vpop.xlane.xlu0 %450
          %452 = vmax.xlane.f32.xlu0 %v426
          %v453 = vpop.xlane.xlu0 %452
          %454 = vmax.xlane.f32.xlu0 %v427
          %v455 = vpop.xlane.xlu0 %454
          %456 = vmax.xlane.f32.xlu0 %v428
          %v457 = vpop.xlane.xlu0 %456
          %458 = vmax.xlane.f32.xlu0 %v429
          %v459 = vpop.xlane.xlu0 %458
          %460 = vmax.xlane.f32.xlu0 %v430
          %v461 = vpop.xlane.xlu0 %460
          %462 = vmax.xlane.f32.xlu0 %v431
          %v463 = vpop.xlane.xlu0 %462
          %v480 = vlaneseq
          %v481 = vand.u32 %v480, 127
          %v482 = vlaneseq
          %v483 = vshrl.u32 %v482, 7
          %v484 = vsub.s32 %v481, %v483
          %v485 = vrot.slane %v400, %v484
          %v486 = vadd.s32 %v481, 4294967288
          %v487 = vlaneseq
          %v488 = vshrl.u32 %v487, 7
          %v489 = vsub.s32 %v486, %v488
          %v490 = vrot.slane %v401, %v489
          %vm491 = vcmask 130112
          %v492 = vsel %vm491, %v490, %v485
          %v493 = vadd.s32 %v481, 4294967280
          %v494 = vlaneseq
          %v495 = vshrl.u32 %v494, 7
          %v496 = vsub.s32 %v493, %v495
          %v497 = vrot.slane %v402, %v496
          %vm498 = vcmask 195712
          %v499 = vsel %vm498, %v497, %v492
          %v500 = vadd.s32 %v481, 4294967272
          %v501 = vlaneseq
          %v502 = vshrl.u32 %v501, 7
          %v503 = vsub.s32 %v500, %v502
          %v504 = vrot.slane %v403, %v503
          %vm505 = vcmask 261312
          %v506 = vsel %vm505, %v504, %v499
          %v507 = vadd.s32 %v481, 4294967264
          %v508 = vlaneseq
          %v509 = vshrl.u32 %v508, 7
          %v510 = vsub.s32 %v507, %v509
          %v511 = vrot.slane %v404, %v510
          %vm512 = vcmask 326912
          %v513 = vsel %vm512, %v511, %v506
          %v514 = vadd.s32 %v481, 4294967256
          %v515 = vlaneseq
          %v516 = vshrl.u32 %v515, 7
          %v517 = vsub.s32 %v514, %v516
          %v518 = vrot.slane %v405, %v517
          %vm519 = vcmask 392512
          %v520 = vsel %vm519, %v518, %v513
          %v521 = vadd.s32 %v481, 4294967248
          %v522 = vlaneseq
          %v523 = vshrl.u32 %v522, 7
          %v524 = vsub.s32 %v521, %v523
          %v525 = vrot.slane %v406, %v524
          %vm526 = vcmask 458112
          %v527 = vsel %vm526, %v525, %v520
          %v528 = vadd.s32 %v481, 4294967240
          %v529 = vlaneseq
          %v530 = vshrl.u32 %v529, 7
          %v531 = vsub.s32 %v528, %v530
          %v532 = vrot.slane %v407, %v531
          %vm533 = vcmask 523712
          %v534 = vsel %vm533, %v532, %v527
          %v535 = vlaneseq
          %v536 = vshrl.u32 %v535, 7
          %v537 = vsub.s32 %v481, %v536
          %v538 = vrot.slane %v408, %v537
          %v539 = vlaneseq
          %v540 = vshrl.u32 %v539, 7
          %v541 = vsub.s32 %v486, %v540
          %v542 = vrot.slane %v409, %v541
          %v543 = vsel %vm491, %v542, %v538
          %v544 = vlaneseq
          %v545 = vshrl.u32 %v544, 7
          %v546 = vsub.s32 %v493, %v545
          %v547 = vrot.slane %v410, %v546
          %v548 = vsel %vm498, %v547, %v543
          %v549 = vlaneseq
          %v550 = vshrl.u32 %v549, 7
          %v551 = vsub.s32 %v500, %v550
          %v552 = vrot.slane %v411, %v551
          %v553 = vsel %vm505, %v552, %v548
          %v554 = vlaneseq
          %v555 = vshrl.u32 %v554, 7
          %v556 = vsub.s32 %v507, %v555
          %v557 = vrot.slane %v412, %v556
          %v558 = vsel %vm512, %v557, %v553
          %v559 = vlaneseq
          %v560 = vshrl.u32 %v559, 7
          %v561 = vsub.s32 %v514, %v560
          %v562 = vrot.slane %v413, %v561
          %v563 = vsel %vm519, %v562, %v558
          %v564 = vlaneseq
          %v565 = vshrl.u32 %v564, 7
          %v566 = vsub.s32 %v521, %v565
          %v567 = vrot.slane %v414, %v566
          %v568 = vsel %vm526, %v567, %v563
          %v569 = vlaneseq
          %v570 = vshrl.u32 %v569, 7
          %v571 = vsub.s32 %v528, %v570
          %v572 = vrot.slane %v415, %v571
          %v573 = vsel %vm533, %v572, %v568
          %vm574 = vcmask 1041409
          %v575 = vsel %vm574, %v573, %v534
          %vm577 = vcmask 517120
          %578 = vst.msk [vmem:[#allocation4] sm:$0x3] %vm577, %v575
          %v595 = vlaneseq
          %v596 = vshrl.u32 %v595, 7
          %v597 = vsub.s32 %v481, %v596
          %v598 = vrot.slane %v433, %v597
          %v599 = vlaneseq
          %v600 = vshrl.u32 %v599, 7
          %v601 = vsub.s32 %v486, %v600
          %v602 = vrot.slane %v435, %v601
          %v603 = vsel %vm491, %v602, %v598
          %v604 = vlaneseq
          %v605 = vshrl.u32 %v604, 7
          %v606 = vsub.s32 %v493, %v605
          %v607 = vrot.slane %v437, %v606
          %v608 = vsel %vm498, %v607, %v603
          %v609 = vlaneseq
          %v610 = vshrl.u32 %v609, 7
          %v611 = vsub.s32 %v500, %v610
          %v612 = vrot.slane %v439, %v611
          %v613 = vsel %vm505, %v612, %v608
          %v614 = vlaneseq
          %v615 = vshrl.u32 %v614, 7
          %v616 = vsub.s32 %v507, %v615
          %v617 = vrot.slane %v441, %v616
          %v618 = vsel %vm512, %v617, %v613
          %v619 = vlaneseq
          %v620 = vshrl.u32 %v619, 7
          %v621 = vsub.s32 %v514, %v620
          %v622 = vrot.slane %v443, %v621
          %v623 = vsel %vm519, %v622, %v618
          %v624 = vlaneseq
          %v625 = vshrl.u32 %v624, 7
          %v626 = vsub.s32 %v521, %v625
          %v627 = vrot.slane %v445, %v626
          %v628 = vsel %vm526, %v627, %v623
          %v629 = vlaneseq
          %v630 = vshrl.u32 %v629, 7
          %v631 = vsub.s32 %v528, %v630
          %v632 = vrot.slane %v447, %v631
          %v633 = vsel %vm533, %v632, %v628
          %v634 = vlaneseq
          %v635 = vshrl.u32 %v634, 7
          %v636 = vsub.s32 %v481, %v635
          %v637 = vrot.slane %v449, %v636
          %v638 = vlaneseq
          %v639 = vshrl.u32 %v638, 7
          %v640 = vsub.s32 %v486, %v639
          %v641 = vrot.slane %v451, %v640
          %v642 = vsel %vm491, %v641, %v637
          %v643 = vlaneseq
          %v644 = vshrl.u32 %v643, 7
          %v645 = vsub.s32 %v493, %v644
          %v646 = vrot.slane %v453, %v645
          %v647 = vsel %vm498, %v646, %v642
          %v648 = vlaneseq
          %v649 = vshrl.u32 %v648, 7
          %v650 = vsub.s32 %v500, %v649
          %v651 = vrot.slane %v455, %v650
          %v652 = vsel %vm505, %v651, %v647
          %v653 = vlaneseq
          %v654 = vshrl.u32 %v653, 7
          %v655 = vsub.s32 %v507, %v654
          %v656 = vrot.slane %v457, %v655
          %v657 = vsel %vm512, %v656, %v652
          %v658 = vlaneseq
          %v659 = vshrl.u32 %v658, 7
          %v660 = vsub.s32 %v514, %v659
          %v661 = vrot.slane %v459, %v660
          %v662 = vsel %vm519, %v661, %v657
          %v663 = vlaneseq
          %v664 = vshrl.u32 %v663, 7
          %v665 = vsub.s32 %v521, %v664
          %v666 = vrot.slane %v461, %v665
          %v667 = vsel %vm526, %v666, %v662
          %v668 = vlaneseq
          %v669 = vshrl.u32 %v668, 7
          %v670 = vsub.s32 %v528, %v669
          %v671 = vrot.slane %v463, %v670
          %v672 = vsel %vm533, %v671, %v667
          %v673 = vsel %vm574, %v672, %v633
          %675 = vst.msk [vmem:[#allocation4 + $0x2] sm:$0x3] %vm577, %v673
          %v676 = vld [vmem:[#allocation4] sm:$0xf]
          %v677 = vld [vmem:[%s1] sm:$0xff]
          %v678 = vld [vmem:[%s1 + $0x8] sm:$0xff]
          %v679 = vld [vmem:[%s1 + $0x10] sm:$0xff]
          %v680 = vld [vmem:[%s1 + $0x18] sm:$0xff]
          %v681 = vld [vmem:[%s1 + $0x20] sm:$0xff]
          %v682 = vld [vmem:[%s1 + $0x28] sm:$0xff]
          %v683 = vld [vmem:[%s1 + $0x30] sm:$0xff]
          %v684 = vld [vmem:[%s1 + $0x38] sm:$0xff]
          %vm685 = vcmask 523264
          %v687 = vsel %vm685, %v676, 0
          %689 = vmatprep.subr.mxu0 0.0
          %690 = vmatpush1.msra.mxu0 %v677
          %691 = vmatprep.subr.mxu0 0.0
          %692 = vmatpush1.msra.mxu0 %v678
          %693 = vmatprep.subr.mxu0 0.0
          %694 = vmatpush1.msra.mxu0 %v679
          %695 = vmatprep.subr.mxu0 0.0
          %696 = vmatpush1.msra.mxu0 %v680
          %697 = vmatprep.subr.mxu0 0.0
          %698 = vmatpush1.msra.mxu0 %v681
          %699 = vmatprep.subr.mxu0 0.0
          %700 = vmatpush1.msra.mxu0 %v682
          %701 = vmatprep.subr.mxu0 0.0
          %702 = vmatpush1.msra.mxu0 %v683
          %703 = vmatprep.subr.mxu0 0.0
          %704 = vmatpush1.msra.mxu0 %v684
          %705 = vmatprep.subr.mxu0 0.0
          %706 = vmatpush1.msra.mxu0 0.0
          %707 = vmatprep.subr.mxu0 0.0
          %708 = vmatpush1.msra.mxu0 0.0
          %709 = vmatprep.subr.mxu0 0.0
          %710 = vmatpush1.msra.mxu0 0.0
          %711 = vmatprep.subr.mxu0 0.0
          %712 = vmatpush1.msra.mxu0 0.0
          %713 = vmatprep.subr.mxu0 0.0
          %714 = vmatpush1.msra.mxu0 0.0
          %715 = vmatprep.subr.mxu0 0.0
          %716 = vmatpush1.msra.mxu0 0.0
          %717 = vmatprep.subr.mxu0 0.0
          %718 = vmatpush1.msra.mxu0 0.0
          %719 = vmatprep.subr.mxu0 0.0
          %720 = vmatpush1.msra.mxu0 0.0
          %721 = vmatprep.subr.mxu0 0.0
          %722 = vmatpush1.msra.mxu0 0.0
          %723 = vmatprep.subr.mxu0 0.0
          %724 = vmatpush1.msra.mxu0 0.0
          %725 = vmatprep.subr.mxu0 0.0
          %726 = vmatpush1.msra.mxu0 0.0
          %727 = vmatprep.subr.mxu0 0.0
          %728 = vmatpush1.msra.mxu0 0.0
          %729 = vmatprep.subr.mxu0 0.0
          %730 = vmatpush1.msra.mxu0 0.0
          %731 = vmatprep.subr.mxu0 0.0
          %732 = vmatpush1.msra.mxu0 0.0
          %733 = vmatprep.subr.mxu0 0.0
          %734 = vmatpush1.msra.mxu0 0.0
          %735 = vmatprep.subr.mxu0 0.0
          %736 = vmatpush1.msra.mxu0 0.0
          %737 = vmatprep.subr.mxu0 0.0
          %738 = vmatpush1.msra.mxu0 0.0
          %739 = vmatprep.subr.mxu0 0.0
          %740 = vmatpush1.msra.mxu0 0.0
          %741 = vmatprep.subr.mxu0 0.0
          %742 = vmatpush1.msra.mxu0 0.0
          %743 = vmatprep.subr.mxu0 0.0
          %744 = vmatpush1.msra.mxu0 0.0
          %745 = vmatprep.subr.mxu0 0.0
          %746 = vmatpush1.msra.mxu0 0.0
          %747 = vmatprep.subr.mxu0 0.0
          %748 = vmatpush1.msra.mxu0 0.0
          %749 = vmatprep.subr.mxu0 0.0
          %750 = vmatpush1.msra.mxu0 0.0
          %751 = vmatprep.subr.mxu0 0.0
          %752 = vmatpush1.msra.mxu0 0.0
          %753 = vmatprep.mubr.f32.mxu0 0.0
          %754 = vmatmul.mubr.f32.gmra.mrb[0].mxu0 %v687
          %v755 = vpop.f32.mrb[0].mxu0
          %v756 = vadd.f32 0.0, %v755
          %v757 = vpop.f32.mrb[0].mxu0
          %758 = vdwg.mxu0
          %v759 = vmax.f32 %v756, 0.0
          %v760 = vld [vmem:[%s2] sm:$0xf]
          %vm761 = vcmask 31744
          %v763 = vsel %vm761, %v759, 0
          %vm765 = vcmask 1043456
          %v767 = vsel %vm765, %v760, 0
          %769 = vmatprep.subr.mxu0 0.0
          %770 = vmatpush1.msra.mxu0 %v767
          %771 = vmatprep.subr.mxu0 0.0
          %772 = vmatpush1.msra.mxu0 0.0
          %773 = vmatprep.subr.mxu0 0.0
          %774 = vmatpush1.msra.mxu0 0.0
          %775 = vmatprep.subr.mxu0 0.0
          %776 = vmatpush1.msra.mxu0 0.0
          %777 = vmatprep.subr.mxu0 0.0
          %778 = vmatpush1.msra.mxu0 0.0
          %779 = vmatprep.subr.mxu0 0.0
          %780 = vmatpush1.msra.mxu0 0.0
          %781 = vmatprep.subr.mxu0 0.0
          %782 = vmatpush1.msra.mxu0 0.0
          %783 = vmatprep.subr.mxu0 0.0
          %784 = vmatpush1.msra.mxu0 0.0
          %785 = vmatprep.subr.mxu0 0.0
          %786 = vmatpush1.msra.mxu0 0.0
          %787 = vmatprep.subr.mxu0 0.0
          %788 = vmatpush1.msra.mxu0 0.0
          %789 = vmatprep.subr.mxu0 0.0
          %790 = vmatpush1.msra.mxu0 0.0
          %791 = vmatprep.subr.mxu0 0.0
          %792 = vmatpush1.msra.mxu0 0.0
          %793 = vmatprep.subr.mxu0 0.0
          %794 = vmatpush1.msra.mxu0 0.0
          %795 = vmatprep.subr.mxu0 0.0
          %796 = vmatpush1.msra.mxu0 0.0
          %797 = vmatprep.subr.mxu0 0.0
          %798 = vmatpush1.msra.mxu0 0.0
          %799 = vmatprep.subr.mxu0 0.0
          %800 = vmatpush1.msra.mxu0 0.0
          %801 = vmatprep.subr.mxu0 0.0
          %802 = vmatpush1.msra.mxu0 0.0
          %803 = vmatprep.subr.mxu0 0.0
          %804 = vmatpush1.msra.mxu0 0.0
          %805 = vmatprep.subr.mxu0 0.0
          %806 = vmatpush1.msra.mxu0 0.0
          %807 = vmatprep.subr.mxu0 0.0
          %808 = vmatpush1.msra.mxu0 0.0
          %809 = vmatprep.subr.mxu0 0.0
          %810 = vmatpush1.msra.mxu0 0.0
          %811 = vmatprep.subr.mxu0 0.0
          %812 = vmatpush1.msra.mxu0 0.0
          %813 = vmatprep.subr.mxu0 0.0
          %814 = vmatpush1.msra.mxu0 0.0
          %815 = vmatprep.subr.mxu0 0.0
          %816 = vmatpush1.msra.mxu0 0.0
          %817 = vmatprep.subr.mxu0 0.0
          %818 = vmatpush1.msra.mxu0 0.0
          %819 = vmatprep.subr.mxu0 0.0
          %820 = vmatpush1.msra.mxu0 0.0
          %821 = vmatprep.subr.mxu0 0.0
          %822 = vmatpush1.msra.mxu0 0.0
          %823 = vmatprep.subr.mxu0 0.0
          %824 = vmatpush1.msra.mxu0 0.0
          %825 = vmatprep.subr.mxu0 0.0
          %826 = vmatpush1.msra.mxu0 0.0
          %827 = vmatprep.subr.mxu0 0.0
          %828 = vmatpush1.msra.mxu0 0.0
          %829 = vmatprep.subr.mxu0 0.0
          %830 = vmatpush1.msra.mxu0 0.0
          %831 = vmatprep.subr.mxu0 0.0
          %832 = vmatpush1.msra.mxu0 0.0
          %833 = vmatprep.mubr.f32.mxu0 0.0
          %834 = vmatmul.mubr.f32.gmra.mrb[0].mxu0 %v763
          %v835 = vpop.f32.mrb[0].mxu0
          %v836 = vadd.f32 0.0, %v835
          %v837 = vpop.f32.mrb[0].mxu0
          %838 = vdwg.mxu0
          %v840 = vrot.slane %v836, 2
          %v842 = vadd.f32 %v836, %v840
          %v843 = vxor.u32 %v842, 2147483648
          %v844 = vmul.f32 %v843, 1.442695
          %v845 = vpow.pop %v844
          %v846 = vadd.f32 %v845, 1.0
          %v847 = vrcp.pop %v846
          %v848 = vmul.f32 1.0, %v847
          %849 = vst.msk [vmem:[#allocation8] sm:$0x3] %vm577, %v848
        $region44: #{tpu_custom_call.1} parent=31 // pred_fallthru
          _
        // Predicated region
        $region45: #{tpu_custom_call.1} parent=31 // pred_check
          %p850 = pneg %p118
        $region46: #{tpu_custom_call.1} parent=31 // pred_check_branch
          %852 = sbr.rel (%p850) target = $region48
        $region47: #{tpu_custom_call.1} parent=31 // pred_region
          %s854 = ssub.s32 32, 32
          %855 = vsyncadd [#allocation7], %s854
          %s856 = smul.addr %s22, 32
          %s857 = scalar_lea.hbm %s3, %s856
          %s859 = sshll.u32 [#allocation8], 4
          %s860 = int_to_ptr.vmem [resolvable:$true] %s859
          %862 = dma.vmem_to_hbm [thread:$0]  %s860, 32, %s857, [#allocation7]
        $region48: #{tpu_custom_call.1} parent=31 // pred_fallthru
          _
        // Predicated region
        $region49: #{tpu_custom_call.1} parent=31 // pred_check
          %p863 = pneg %p118
        $region50: #{tpu_custom_call.1} parent=31 // pred_check_branch
          %865 = sbr.rel (%p863) target = $region52
        $region51: #{tpu_custom_call.1} parent=31 // pred_region
          %866 = dma.done [#allocation7], 32
        $region52: #{tpu_custom_call.1} parent=31 // pred_fallthru
          _
      $region32: #{tpu_custom_call.1} parent=5 // pred_fallthru
        _
      %p867 = scmp.le.s32.totalorder 2, %s13
      // Predicated region
      $region53: #{tpu_custom_call.1} parent=5 // pred_check
        %p868 = pneg %p867
      $region54: #{tpu_custom_call.1} parent=5 // pred_check_branch
        %870 = sbr.rel (%p868) target = $region56
      $region55: #{tpu_custom_call.1} parent=5 // pred_region
        %s871 = ssub.s32 %s13, 2
      $region56: #{tpu_custom_call.1} parent=5 // pred_fallthru
        _
    $region6: #{tpu_custom_call.1} parent=1 // loop_footer
      %s17 = sadd.s32 1, %s13
    $region7: #{tpu_custom_call.1} parent=1 // loop_footer_branch
      %12 = sbr.rel target = $region3
    $region8: #{tpu_custom_call.1} parent=1 // loop_exit
      _
    %872 = vsyncpa [#allocation6], 1
    %s873 = scalar_lea.sflag [#allocation6], 1
    %874 = vsyncpa %s873, 1
    %875 = vsyncpa [#allocation7], 1
    %s876 = scalar_lea.sflag [#allocation7], 1
    %877 = vsyncpa %s876, 1

</llo_original>
